<compile_context>
chip_gen: v5e
topology: v5e:2x2
jax: 0.10.0
libtpu: 0.0.40
codegen_flags: <defaults>
</compile_context>

<pallas_src>
import jax
import jax.numpy as jnp
from jax.experimental import pallas as pl
from jax.experimental.pallas import tpu as pltpu


def mean_pool_kernel(x_ref, m_ref, o_ref, acc_ref, cnt_ref):
    # x_ref:   (TB, TS, H)  input dtype
    # m_ref:   (TB, 1, TS)  float32 0/1 mask, S on the lane axis
    # o_ref:   (TB, 1, H)   float32 output
    # acc_ref: (TB, 1, H)   float32 running masked sum
    # cnt_ref: (TB, 1, 1)   float32 running mask count
    s = pl.program_id(1)

    @pl.when(s == 0)
    def _init():
        acc_ref[...] = jnp.zeros_like(acc_ref)
        cnt_ref[...] = jnp.zeros_like(cnt_ref)

    x = x_ref[...]          # (TB, TS, H); no f32 upcast of the big tile
    m = m_ref[...]          # (TB, 1, TS) float32

    # Per-row masked sum on the MXU: (TB,1,TS) @ (TB,TS,H) -> (TB,1,H), f32 acc.
    acc_ref[...] += jnp.einsum(
        "bqs,bsh->bqh", m.astype(x.dtype), x,
        preferred_element_type=jnp.float32)
    # Mask count accumulated in f32 (exact for any realistic S).
    cnt_ref[...] += jnp.sum(m, axis=-1, keepdims=True)    # (TB, 1, 1)

    @pl.when(s == pl.num_programs(1) - 1)
    def _finalize():
        denom = jnp.maximum(cnt_ref[...], 1e-9)            # torch.clamp(min=1e-9)
        inv = pl.reciprocal(denom, approx=True)            # EUP slot, ~free
        o_ref[...] = (acc_ref[...] * inv).astype(o_ref.dtype)


def _pick_tiles(B, S, H, itemsize, budget_bytes=8 << 20):
    """Choose (TB, TS): batch rows per step and sequence tile length.

    Prefer full-sequence blocks with as many batch rows as fit the VMEM budget
    (fewest grid steps, largest DMAs). Only tile S when one full row is too
    big, and then only with lane-aligned (multiple-of-128) tiles so the mask
    block's lane dim stays layout-friendly.
    """
    row_bytes = S * H * itemsize                    # one full-sequence x row
    for tb in (64, 32, 16, 8, 4, 2):
        if B % tb == 0 and 2 * tb * row_bytes <= budget_bytes:
            return tb, S
    if 2 * row_bytes <= budget_bytes:
        return 1, S
    for ts in (4096, 2048, 1024, 512, 256, 128):
        if ts < S and S % ts == 0 and 2 * ts * H * itemsize <= budget_bytes:
            return 1, ts
    # TODO(synk): for very large H with an awkward S, add an H tile axis
    # instead of falling back to one full-sequence block per row.
    return 1, S


def mean_pooling(last_hidden_state, attention_mask):
    B, S, H = last_hidden_state.shape
    assert attention_mask.shape == (B, S)

    x = last_hidden_state
    # (B, 1, S) float32 mask keeps S on the lane axis -> MXU dot in the kernel.
    m = attention_mask.reshape(B, 1, S).astype(jnp.float32)

    TB, TS = _pick_tiles(B, S, H, x.dtype.itemsize)
    grid = (B // TB, S // TS)

    out = pl.pallas_call(
        mean_pool_kernel,
        out_shape=jax.ShapeDtypeStruct((B, 1, H), jnp.float32),
        grid_spec=pltpu.PrefetchScalarGridSpec(
            num_scalar_prefetch=0,
            grid=grid,
            in_specs=[
                pl.BlockSpec((TB, TS, H), lambda b, s: (b, s, 0)),
                pl.BlockSpec((TB, 1, TS), lambda b, s: (b, 0, s)),
            ],
            out_specs=pl.BlockSpec((TB, 1, H), lambda b, s: (b, 0, 0)),
            scratch_shapes=[
                pltpu.VMEM((TB, 1, H), jnp.float32),   # running masked sum
                pltpu.VMEM((TB, 1, 1), jnp.float32),   # running mask count
            ],
        ),
        compiler_params=pltpu.CompilerParams(
            dimension_semantics=("parallel", "arbitrary"),
        ),
    )(x, m)
    return out.reshape(B, H)


def mean_pooling_ref(last_hidden_state, attention_mask):
    # Pure-JAX reference mirroring the PyTorch forward exactly.
    mask = attention_mask[:, :, None].astype(jnp.float32)
    mask = jnp.broadcast_to(mask, last_hidden_state.shape)
    sum_embeddings = jnp.sum(last_hidden_state.astype(jnp.float32) * mask, axis=1)
    sum_mask = jnp.maximum(jnp.sum(mask, axis=1), 1e-9)   # torch.clamp(min=1e-9)
    return sum_embeddings / sum_mask


if __name__ == "__main__":
    key = jax.random.PRNGKey(0)
    k1, k2 = jax.random.split(key)

    B, S, H = 2, 8, 32
    last_hidden_state = jax.random.normal(k1, (B, S, H), dtype=jnp.float32)
    # Binary attention mask with some padding positions zeroed out.
    attention_mask = (jax.random.uniform(k2, (B, S)) > 0.3).astype(jnp.int32)

    out = mean_pooling(last_hidden_state, attention_mask)
    out = jax.block_until_ready(out)

    ref = mean_pooling_ref(last_hidden_state, attention_mask)
    assert out.shape == (B, H)
    # Tolerance allows the approx (EUP) reciprocal used in the finalize step.
    assert jnp.allclose(out, ref, atol=1e-3, rtol=1e-3), "mismatch vs reference"

    print("KERNEL_OK")
</pallas_src>

<mosaic_0001>
module attributes {stable_mosaic.version = 11 : i64} {
  func.func @mean_pool_kernel(%arg0: i32, %arg1: i32, %arg2: memref<2x8x32xf32, #tpu.memory_space<vmem>>, %arg3: memref<2x1x8xf32, #tpu.memory_space<vmem>>, %arg4: memref<2x1x32xf32, #tpu.memory_space<vmem>>, %arg5: memref<2x1x32xf32, #tpu.memory_space<vmem>>, %arg6: memref<2x1x1xf32, #tpu.memory_space<vmem>>) attributes {dimension_semantics = [#tpu.dimension_semantics<parallel>, #tpu.dimension_semantics<arbitrary>], iteration_bounds = array<i64: 1, 1>, scalar_prefetch = 0 : i64, scratch_operands = 2 : i64, tpu.core_type = #tpu.core_type<tc>, window_params = [{transform_indices = @transform_0, window_bounds = array<i64: 2, 8, 32>}, {transform_indices = @transform_1, window_bounds = array<i64: 2, 1, 8>}, {transform_indices = @transform_2, window_bounds = array<i64: 2, 1, 32>}]} {
    %c0_i32 = arith.constant 0 : i32
    %0 = arith.cmpi eq, %arg1, %c0_i32 : i32
    %1 = arith.extui %0 : i1 to i32
    %c0_i32_0 = arith.constant 0 : i32
    %2 = arith.cmpi ne, %1, %c0_i32_0 : i32
    scf.if %2 {
      %cst_21 = arith.constant 0.000000e+00 : f32
      %17 = vector.broadcast %cst_21 : f32 to vector<2x1x32xf32>
      %c0_22 = arith.constant 0 : index
      %c0_23 = arith.constant 0 : index
      %c0_24 = arith.constant 0 : index
      %18 = vector.load %arg5[%c0_22, %c0_23, %c0_24] : memref<2x1x32xf32, #tpu.memory_space<vmem>>, vector<2x1x32xf32>
      tpu.vector_store %arg5[%c0_22, %c0_23, %c0_24], %17 {strides = array<i32>} : memref<2x1x32xf32, #tpu.memory_space<vmem>>, vector<2x1x32xf32>,
      %cst_25 = arith.constant 0.000000e+00 : f32
      %19 = vector.broadcast %cst_25 : f32 to vector<2x1x1xf32>
      %c0_26 = arith.constant 0 : index
      %c0_27 = arith.constant 0 : index
      %c0_28 = arith.constant 0 : index
      %20 = vector.load %arg6[%c0_26, %c0_27, %c0_28] : memref<2x1x1xf32, #tpu.memory_space<vmem>>, vector<2x1x1xf32>
      tpu.vector_store %arg6[%c0_26, %c0_27, %c0_28], %19 {strides = array<i32>} : memref<2x1x1xf32, #tpu.memory_space<vmem>>, vector<2x1x1xf32>,
    } else {
    }
    %c0 = arith.constant 0 : index
    %c0_1 = arith.constant 0 : index
    %c0_2 = arith.constant 0 : index
    %3 = vector.load %arg2[%c0, %c0_1, %c0_2] : memref<2x8x32xf32, #tpu.memory_space<vmem>>, vector<2x8x32xf32>
    %c0_3 = arith.constant 0 : index
    %c0_4 = arith.constant 0 : index
    %c0_5 = arith.constant 0 : index
    %4 = vector.load %arg3[%c0_3, %c0_4, %c0_5] : memref<2x1x8xf32, #tpu.memory_space<vmem>>, vector<2x1x8xf32>
    %c0_6 = arith.constant 0 : index
    %c0_7 = arith.constant 0 : index
    %c0_8 = arith.constant 0 : index
    %5 = vector.load %arg5[%c0_6, %c0_7, %c0_8] : memref<2x1x32xf32, #tpu.memory_space<vmem>>, vector<2x1x32xf32>
    "tpu.trace_start"() <{level = 10 : i32, message = "bqs,bsh->bqh"}> : () -> ()
    %cst = arith.constant dense<0.000000e+00> : vector<2x1x32xf32>
    %6 = tpu.matmul %4, %3, %cst {dimension_numbers = #tpu.dot_dimension_numbers<[2], [1], [1], [2], [0, 0, 0, 1, 1, 2], [0], [0]>} : vector<2x1x8xf32>, vector<2x8x32xf32>, vector<2x1x32xf32> -> vector<2x1x32xf32>
    "tpu.trace_stop"() : () -> ()
    %7 = arith.addf %5, %6 : vector<2x1x32xf32>
    %c0_9 = arith.constant 0 : index
    %c0_10 = arith.constant 0 : index
    %c0_11 = arith.constant 0 : index
    %8 = vector.load %arg5[%c0_9, %c0_10, %c0_11] : memref<2x1x32xf32, #tpu.memory_space<vmem>>, vector<2x1x32xf32>
    tpu.vector_store %arg5[%c0_9, %c0_10, %c0_11], %7 {strides = array<i32>} : memref<2x1x32xf32, #tpu.memory_space<vmem>>, vector<2x1x32xf32>,
    %c0_12 = arith.constant 0 : index
    %c0_13 = arith.constant 0 : index
    %c0_14 = arith.constant 0 : index
    %9 = vector.load %arg6[%c0_12, %c0_13, %c0_14] : memref<2x1x1xf32, #tpu.memory_space<vmem>>, vector<2x1x1xf32>
    %cst_15 = arith.constant dense<0.000000e+00> : vector<2x1xf32>
    %10 = vector.multi_reduction <add>, %4, %cst_15 [2] : vector<2x1x8xf32> to vector<2x1xf32>
    %11 = vector.shape_cast %10 : vector<2x1xf32> to vector<2x1x1xf32>
    %12 = arith.addf %9, %11 : vector<2x1x1xf32>
    %c0_16 = arith.constant 0 : index
    %c0_17 = arith.constant 0 : index
    %c0_18 = arith.constant 0 : index
    %13 = vector.load %arg6[%c0_16, %c0_17, %c0_18] : memref<2x1x1xf32, #tpu.memory_space<vmem>>, vector<2x1x1xf32>
    tpu.vector_store %arg6[%c0_16, %c0_17, %c0_18], %12 {strides = array<i32>} : memref<2x1x1xf32, #tpu.memory_space<vmem>>, vector<2x1x1xf32>,
    %c0_i32_19 = arith.constant 0 : i32
    %14 = arith.cmpi eq, %arg1, %c0_i32_19 : i32
    %15 = arith.extui %14 : i1 to i32
    %c0_i32_20 = arith.constant 0 : i32
    %16 = arith.cmpi ne, %15, %c0_i32_20 : i32
    scf.if %16 {
      %c0_21 = arith.constant 0 : index
      %c0_22 = arith.constant 0 : index
      %c0_23 = arith.constant 0 : index
      %17 = vector.load %arg6[%c0_21, %c0_22, %c0_23] : memref<2x1x1xf32, #tpu.memory_space<vmem>>, vector<2x1x1xf32>
      %cst_24 = arith.constant 9.99999971E-10 : f32
      %18 = vector.broadcast %cst_24 : f32 to vector<2x1x1xf32>
      %19 = arith.maximumf %17, %18 : vector<2x1x1xf32>
      %20 = tpu.reciprocal %19 {approx = true} : vector<2x1x1xf32> -> vector<2x1x1xf32>
      %c0_25 = arith.constant 0 : index
      %c0_26 = arith.constant 0 : index
      %c0_27 = arith.constant 0 : index
      %21 = vector.load %arg5[%c0_25, %c0_26, %c0_27] : memref<2x1x32xf32, #tpu.memory_space<vmem>>, vector<2x1x32xf32>
      %22 = vector.broadcast %20 : vector<2x1x1xf32> to vector<2x1x32xf32>
      %23 = arith.mulf %21, %22 : vector<2x1x32xf32>
      %c0_28 = arith.constant 0 : index
      %c0_29 = arith.constant 0 : index
      %c0_30 = arith.constant 0 : index
      %24 = vector.load %arg4[%c0_28, %c0_29, %c0_30] : memref<2x1x32xf32, #tpu.memory_space<vmem>>, vector<2x1x32xf32>
      tpu.vector_store %arg4[%c0_28, %c0_29, %c0_30], %23 {strides = array<i32>} : memref<2x1x32xf32, #tpu.memory_space<vmem>>, vector<2x1x32xf32>,
    } else {
    }
    return
  }
  func.func @transform_0(%arg0: i32, %arg1: i32) -> (i32, i32, i32) {
    %c0_i32 = arith.constant 0 : i32
    %c0_i32_0 = arith.constant 0 : i32
    return %arg0, %arg1, %c0_i32 : i32, i32, i32
  }
  func.func @transform_1(%arg0: i32, %arg1: i32) -> (i32, i32, i32) {
    %c0_i32 = arith.constant 0 : i32
    %c0_i32_0 = arith.constant 0 : i32
    return %arg0, %c0_i32, %arg1 : i32, i32, i32
  }
  func.func @transform_2(%arg0: i32, %arg1: i32) -> (i32, i32, i32) {
    %c0_i32 = arith.constant 0 : i32
    %c0_i32_0 = arith.constant 0 : i32
    %c0_i32_1 = arith.constant 0 : i32
    return %arg0, %c0_i32, %c0_i32_0 : i32, i32, i32
  }
}

</mosaic_0001>

<llo_original>
// kernel: tpu_custom_call.1
$region0: #{tpu_custom_call.1}
  #allocation0 [shape = 'u32[]', space=smem, size = 0x4, offset = 0x4, fixed_abs, tag = 'smem constant byte address 0x4 - core index']
  #allocation1 [shape = 'u32[72,128]{1,0:T(1,128)}', space=vmem, size = 0x9000, scoped, tag = 'internal scratch']
  #allocation2 [shape = 'f32[2,1,32]{2,1,0:T(1,128)}', space=vmem, size = 0x400, scoped, tag = 'scratch operand']
  #allocation3 [shape = 'f32[2,1,1]{2,1,0:T(1,128)}', space=vmem, size = 0x400, scoped, tag = 'scratch operand']
  %s0 = inlined_call_operand.hbm [shape: f32[2,8,32], index: 0, kind: input, shape index: {}]
  %s1 = inlined_call_operand.hbm [shape: f32[2,1,8], index: 1, kind: input, shape index: {}]
  %s2 = inlined_call_operand.hbm [shape: f32[2,1,32], index: 2, kind: output, shape index: {}]
  %s3 = sld [smem:[#allocation0]]
  $region34: #{tpu_custom_call.1} parent=0
    _
  %s5 = ssub.s32 1, %s3
  %s6 = scalar_select 0, %s5, %s3
  $region1: #{tpu_custom_call.1} parent=0
    #allocation4 [shape = 'u8[8192]{0}', space=vmem, size = 0x2000, scoped, tag = 'input window, operand 0, single buffered']
    #allocation5 [shape = 's32[1]{0}', space=sflag, size = 0x4, scoped, tag = 'scoped memory for tpu_custom_call.1']
    #allocation6 [shape = 's32[1]{0}', space=sflag, size = 0x4, scoped, tag = 'scoped memory for tpu_custom_call.1']
    #allocation7 [shape = 'u8[1024]{0}', space=vmem, size = 0x400, scoped, tag = 'input window, operand 1, single buffered']
    #allocation8 [shape = 's32[1]{0}', space=sflag, size = 0x4, scoped, tag = 'scoped memory for tpu_custom_call.1']
    #allocation9 [shape = 'u8[1024]{0}', space=vmem, size = 0x400, scoped, tag = 'output window, operand 0, single buffered']
    %7 = vsyncpa [#allocation5], 0
    %8 = vsyncpa [#allocation8], 0
    %9 = vsyncpa [#allocation6], 0
    // Predicated region
    $region2: #{tpu_custom_call.1} parent=1 // pred_check
      _
    $region3: #{tpu_custom_call.1} parent=1 // pred_check_branch
      %11 = sbr.rel (0) target = $region5
    $region4: #{tpu_custom_call.1} parent=1 // pred_region
      %13 = vsyncadd [#allocation5], 0
      %s14 = sshll.u32 %s0, 4
      %s15 = int_to_ptr.hbm [resolvable:$true] %s14
      %s16 = sshll.u32 [#allocation4], 4
      %s17 = int_to_ptr.vmem [resolvable:$true] %s16
      %22 = dma.hbm_to_vmem [thread:$0]  %s15, 256, %s17, [#allocation5], 128, 128, 8
    $region5: #{tpu_custom_call.1} parent=1 // pred_fallthru
      _
    // Predicated region
    $region6: #{tpu_custom_call.1} parent=1 // pred_check
      _
    $region7: #{tpu_custom_call.1} parent=1 // pred_check_branch
      %24 = sbr.rel (0) target = $region9
    $region8: #{tpu_custom_call.1} parent=1 // pred_region
      %26 = vsyncadd [#allocation8], 0
      %s27 = sshll.u32 %s1, 4
      %s28 = int_to_ptr.hbm [resolvable:$true] %s27
      %s29 = sshll.u32 [#allocation7], 4
      %s30 = int_to_ptr.vmem [resolvable:$true] %s29
      %35 = dma.hbm_to_vmem [thread:$0]  %s28, 32, %s30, [#allocation8], 16, 16, 1
    $region9: #{tpu_custom_call.1} parent=1 // pred_fallthru
      _
    // Predicated region
    $region10: #{tpu_custom_call.1} parent=1 // pred_check
      _
    $region11: #{tpu_custom_call.1} parent=1 // pred_check_branch
      %37 = sbr.rel (0) target = $region13
    $region12: #{tpu_custom_call.1} parent=1 // pred_region
      %39 = dma.done [#allocation5], 256
    $region13: #{tpu_custom_call.1} parent=1 // pred_fallthru
      _
    // Predicated region
    $region14: #{tpu_custom_call.1} parent=1 // pred_check
      _
    $region15: #{tpu_custom_call.1} parent=1 // pred_check_branch
      %41 = sbr.rel (0) target = $region17
    $region16: #{tpu_custom_call.1} parent=1 // pred_region
      %43 = dma.done [#allocation8], 32
    $region17: #{tpu_custom_call.1} parent=1 // pred_fallthru
      _
    %p44 = scmp.eq.s32.totalorder 0, 0
    // Predicated region
    $region18: #{tpu_custom_call.1} parent=1 // pred_check
      %p45 = pneg %p44
    $region19: #{tpu_custom_call.1} parent=1 // pred_check_branch
      %47 = sbr.rel (%p45) target = $region21
    $region20: #{tpu_custom_call.1} parent=1 // pred_region
      %vm48 = vcmask 253952
      %49 = vst.msk [vmem:[#allocation2] sm:$0x1] %vm48, 0.0
      %50 = vst.msk [vmem:[#allocation2 + $0x1] sm:$0x1] %vm48, 0.0
      %vm51 = vcmask 0
      %52 = vst.msk [vmem:[#allocation3] sm:$0x1] %vm51, 0.0
      %53 = vst.msk [vmem:[#allocation3 + $0x1] sm:$0x1] %vm51, 0.0
    $region21: #{tpu_custom_call.1} parent=1 // pred_fallthru
      _
    %v54 = vld [vmem:[#allocation4] sm:$0xff]
    %v55 = vld [vmem:[#allocation4 + $0x8] sm:$0xff]
    %v56 = vld [vmem:[#allocation7] sm:$0x1]
    %v57 = vld [vmem:[#allocation7 + $0x1] sm:$0x1]
    %v58 = vld [vmem:[#allocation2] sm:$0x1]
    %v59 = vld [vmem:[#allocation2 + $0x1] sm:$0x1]
    %vm60 = vcmask 64512
    %v62 = vsel %vm60, %v56, 0
    %64 = vmatpush.msra.mxu0 0.0
    %65 = vmatpush.msra.mxu0 0.0
    %66 = vmatpush.msra.mxu0 0.0
    %67 = vmatpush.msra.mxu0 0.0
    %68 = vmatpush.msra.mxu0 0.0
    %69 = vmatpush.msra.mxu0 0.0
    %70 = vmatpush.msra.mxu0 0.0
    %71 = vmatpush.msra.mxu0 0.0
    %72 = vmatpush.msra.mxu0 0.0
    %73 = vmatpush.msra.mxu0 0.0
    %74 = vmatpush.msra.mxu0 0.0
    %75 = vmatpush.msra.mxu0 0.0
    %76 = vmatpush.msra.mxu0 0.0
    %77 = vmatpush.msra.mxu0 0.0
    %78 = vmatpush.msra.mxu0 0.0
    %79 = vmatpush.msra.mxu0 %v54
    %80 = vmatmul.f32.gmra.mxu0 %v62
    %v81 = vpop.f32.mrf.mxu0
    %v82 = vadd.f32 0.0, %v81
    %83 = vdwg.mxu0
    %v85 = vsel %vm60, %v57, 0
    %87 = vmatpush.msra.mxu0 0.0
    %88 = vmatpush.msra.mxu0 0.0
    %89 = vmatpush.msra.mxu0 0.0
    %90 = vmatpush.msra.mxu0 0.0
    %91 = vmatpush.msra.mxu0 0.0
    %92 = vmatpush.msra.mxu0 0.0
    %93 = vmatpush.msra.mxu0 0.0
    %94 = vmatpush.msra.mxu0 0.0
    %95 = vmatpush.msra.mxu0 0.0
    %96 = vmatpush.msra.mxu0 0.0
    %97 = vmatpush.msra.mxu0 0.0
    %98 = vmatpush.msra.mxu0 0.0
    %99 = vmatpush.msra.mxu0 0.0
    %100 = vmatpush.msra.mxu0 0.0
    %101 = vmatpush.msra.mxu0 0.0
    %102 = vmatpush.msra.mxu0 %v55
    %103 = vmatmul.f32.gmra.mxu0 %v85
    %v104 = vpop.f32.mrf.mxu0
    %v105 = vadd.f32 0.0, %v104
    %106 = vdwg.mxu0
    %v107 = vadd.f32 %v58, %v82
    %v108 = vadd.f32 %v59, %v105
    %vm109 = vcmask 253952
    %110 = vst.msk [vmem:[#allocation2] sm:$0x1] %vm109, %v107
    %111 = vst.msk [vmem:[#allocation2 + $0x1] sm:$0x1] %vm109, %v108
    %v112 = vld [vmem:[#allocation3] sm:$0x1]
    %v113 = vld [vmem:[#allocation3 + $0x1] sm:$0x1]
    %vm114 = vcmask 57344
    %v115 = vsel %vm114, %v56, 0.0
    %116 = vadd.xlane.f32.xlu0 %v115
    %v117 = vpop.xlane.xlu0 %116
    %v118 = vsel %vm114, %v57, 0.0
    %119 = vadd.xlane.f32.xlu0 %v118
    %v120 = vpop.xlane.xlu0 %119
    %v121 = vadd.f32 %v112, %v117
    %v122 = vadd.f32 %v113, %v120
    %vm123 = vcmask 0
    %124 = vst.msk [vmem:[#allocation3] sm:$0x1] %vm123, %v121
    %125 = vst.msk [vmem:[#allocation3 + $0x1] sm:$0x1] %vm123, %v122
    // Predicated region
    $region22: #{tpu_custom_call.1} parent=1 // pred_check
      %p126 = pneg %p44
    $region23: #{tpu_custom_call.1} parent=1 // pred_check_branch
      %128 = sbr.rel (%p126) target = $region25
    $region24: #{tpu_custom_call.1} parent=1 // pred_region
      %v129 = vld [vmem:[#allocation3] sm:$0x1]
      %v130 = vld [vmem:[#allocation3 + $0x1] sm:$0x1]
      %v131 = vmax.f32 %v129, 1e-09
      %v132 = vmax.f32 %v130, 1e-09
      %v133 = vrcp.pop %v131
      %v134 = vrcp.pop %v132
      %v135 = vld [vmem:[#allocation2] sm:$0x1]
      %v136 = vld [vmem:[#allocation2 + $0x1] sm:$0x1]
      %138 = vset.pattern.permute.xlu0 0
      %139 = vperm.xlu0 %138, %v133
      %v140 = vpop.permute.xlu0 %139
      %v142 = vperm.slane %v140, 0
      %144 = vset.pattern.permute.xlu0 0
      %145 = vperm.xlu0 %144, %v134
      %v146 = vpop.permute.xlu0 %145
      %v148 = vperm.slane %v146, 0
      %v149 = vmul.f32 %v135, %v142
      %v150 = vmul.f32 %v136, %v148
      %151 = vst.msk [vmem:[#allocation9] sm:$0x1] %vm109, %v149
      %152 = vst.msk [vmem:[#allocation9 + $0x1] sm:$0x1] %vm109, %v150
    $region25: #{tpu_custom_call.1} parent=1 // pred_fallthru
      _
    // Predicated region
    $region26: #{tpu_custom_call.1} parent=1 // pred_check
      _
    $region27: #{tpu_custom_call.1} parent=1 // pred_check_branch
      %154 = sbr.rel (0) target = $region29
    $region28: #{tpu_custom_call.1} parent=1 // pred_region
      %156 = vsyncadd [#allocation6], 0
      %s157 = sshll.u32 [#allocation9], 4
      %s158 = int_to_ptr.vmem [resolvable:$true] %s157
      %s159 = sshll.u32 %s2, 4
      %s160 = int_to_ptr.hbm [resolvable:$true] %s159
      %165 = dma.vmem_to_hbm [thread:$0]  %s158, 32, %s160, [#allocation6], 16, 16, 1
    $region29: #{tpu_custom_call.1} parent=1 // pred_fallthru
      _
    // Predicated region
    $region30: #{tpu_custom_call.1} parent=1 // pred_check
      _
    $region31: #{tpu_custom_call.1} parent=1 // pred_check_branch
      %167 = sbr.rel (0) target = $region33
    $region32: #{tpu_custom_call.1} parent=1 // pred_region
      %169 = dma.done [#allocation6], 32
    $region33: #{tpu_custom_call.1} parent=1 // pred_fallthru
      _
    %170 = vsyncpa [#allocation5], 1
    %171 = vsyncpa [#allocation8], 1
    %172 = vsyncpa [#allocation6], 1

</llo_original>
